<compile_context>
chip_gen: v5e
topology: v5e:2x2
jax: 0.10.0
libtpu: 0.0.40
codegen_flags: <defaults>
</compile_context>

<pallas_src>
import jax
import jax.numpy as jnp
from jax.experimental import pallas as pl
from jax.experimental.pallas import tpu as pltpu

LANE = 128      # TPU lane width: feature axes padded to a multiple of this.
SUBLANE = 8     # sublane granularity: time-chunk K is a multiple of this.


def _round_up(n, m):
    return ((n + m - 1) // m) * m


# -----------------------------------------------------------------------------
# Phase 1 kernel: batched embedding gather + input projection.
#   gi[t, :] = Embedding[tokens[t]] @ W_ih + (b_ih + b_hh folded for r,z)
# -----------------------------------------------------------------------------
def encode_kernel(toks_ref,      # (K, 1)  int32
                  emb_ref,       # (Vp, Hp) bf16  -- resident embedding table
                  w_ih_ref,      # (Hp, 3Hp) bf16 -- fused [r|z|n] slabs
                  b_i_ref,       # (1, 3Hp) f32   -- folded gate bias
                  gi_ref):       # (K, 3Hp) f32
    K = toks_ref.shape[0]
    Vp = emb_ref.shape[0]
    tok = toks_ref[...]                                        # (K, 1) int32
    vocab = jax.lax.broadcasted_iota(jnp.int32, (K, Vp), 1)    # (K, Vp)
    onehot = (vocab == tok).astype(jnp.bfloat16)               # exact gather
    x = jnp.dot(onehot, emb_ref[...], preferred_element_type=jnp.float32)
    gi_ref[...] = (jnp.dot(x.astype(jnp.bfloat16), w_ih_ref[...],
                           preferred_element_type=jnp.float32)
                   + b_i_ref[...])


# -----------------------------------------------------------------------------
# Phase 2 kernel: the GRU recurrence. One grid step == K time steps.
# -----------------------------------------------------------------------------
def make_gru_recurrence_kernel(T, Tp):
    mask_tail = Tp > T   # padded trailing steps must not update the carry

    def kernel(gi_ref,       # (K, 3Hp) f32 -- precomputed input projection
               h0_ref,       # (1, Hp)  f32 -- initial hidden
               w_hh_ref,     # (Hp, 3Hp) bf16 (resident)
               b_hn_ref,     # (1, Hp)  f32 -- b_hh of the n gate
               h_all_ref,    # (K, Hp)  f32 -- per-step hidden states (output)
               h_carry_ref): # (1, Hp)  f32 -- carried hidden (resident output)
        K, Hp = h_all_ref.shape
        c = pl.program_id(0)

        @pl.when(c == 0)
        def _():
            h_carry_ref[...] = h0_ref[...]

        h = h_carry_ref[...]            # (1, Hp) f32
        b_hn = b_hn_ref[...]
        w_hh = w_hh_ref[...]

        # K is small and static -> full unroll with static slice indices
        # (equivalent to lax.fori_loop(..., unroll=True) at these sizes).
        for k in range(K):
            gi = gi_ref[pl.ds(k, 1), :]                        # (1, 3Hp) f32
            # TODO(synk): for very long sequences keep the LHS in f32 to
            # avoid compounding bf16 quantization of the recurrent state.
            gh = jnp.dot(h.astype(jnp.bfloat16), w_hh,
                         preferred_element_type=jnp.float32)   # (1, 3Hp) f32
            i_r, i_z, i_n = gi[:, :Hp], gi[:, Hp:2 * Hp], gi[:, 2 * Hp:]
            h_r, h_z, h_n = gh[:, :Hp], gh[:, Hp:2 * Hp], gh[:, 2 * Hp:]
            r = jax.nn.sigmoid(i_r + h_r)      # b_ih_r + b_hh_r folded in gi
            z = jax.nn.sigmoid(i_z + h_z)      # b_ih_z + b_hh_z folded in gi
            n = jnp.tanh(i_n + r * (h_n + b_hn))
            h_new = (1.0 - z) * n + z * h      # PyTorch GRU update rule
            if mask_tail:
                h_new = jnp.where(c * K + k < T, h_new, h)
            h_all_ref[pl.ds(k, 1), :] = h_new
            h = h_new

        h_carry_ref[...] = h

    return kernel


# -----------------------------------------------------------------------------
# Phase 3 kernel: batched decoder  logits = H_all @ W_dec + b_dec
# -----------------------------------------------------------------------------
def decode_kernel(h_ref,        # (K, Hp) f32
                  w_dec_ref,    # (Hp, Op) bf16 (resident)
                  b_dec_ref,    # (1, Op)  f32
                  o_ref):       # (K, Op)  f32
    o_ref[...] = (jnp.dot(h_ref[...].astype(jnp.bfloat16), w_dec_ref[...],
                          preferred_element_type=jnp.float32)
                  + b_dec_ref[...])


# -----------------------------------------------------------------------------
# Wrappers
# -----------------------------------------------------------------------------
def rnn_forward_seq(tokens, hidden0, kp, max_chunk=32):
    """Run the GRU over a token sequence (== T calls of the module's forward).

    tokens:  (T,) int32
    hidden0: (1, 1, H) f32
    returns: logits (T, O) f32, hidden (1, 1, H) f32
    """
    tokens = tokens.astype(jnp.int32).reshape(-1)
    T = int(tokens.shape[0])
    H, O, Hp, Op = kp["H"], kp["O"], kp["Hp"], kp["Op"]
    Vp = kp["emb"].shape[0]

    # Time-chunk: K steps per grid iteration (multiple of 8 sublanes).
    K = min(_round_up(max_chunk, SUBLANE), _round_up(T, SUBLANE))
    Tp = _round_up(T, K)
    n_chunks = Tp // K

    toks_p = jnp.zeros((Tp, 1), jnp.int32).at[:T, 0].set(tokens)
    h0 = jnp.zeros((1, Hp), jnp.float32).at[:, :H].set(hidden0.reshape(1, H))

    # ---- Phase 1: batched input projection (parallel over time chunks).
    gi = pl.pallas_call(
        encode_kernel,
        out_shape=jax.ShapeDtypeStruct((Tp, 3 * Hp), jnp.float32),
        grid_spec=pltpu.PrefetchScalarGridSpec(
            num_scalar_prefetch=0,
            grid=(n_chunks,),
            in_specs=[
                pl.BlockSpec((K, 1), lambda i: (i, 0)),           # tokens
                pl.BlockSpec((Vp, Hp), lambda i: (0, 0)),         # emb (resident)
                pl.BlockSpec((Hp, 3 * Hp), lambda i: (0, 0)),     # W_ih (resident)
                pl.BlockSpec((1, 3 * Hp), lambda i: (0, 0)),      # folded bias
            ],
            out_specs=pl.BlockSpec((K, 3 * Hp), lambda i: (i, 0)),
        ),
        compiler_params=pltpu.CompilerParams(
            dimension_semantics=("parallel",)),
    )(toks_p, kp["emb"], kp["w_ih"], kp["b_i"])

    # ---- Phase 2: serial GRU recurrence (time axis is recurrent).
    h_all, h_last = pl.pallas_call(
        make_gru_recurrence_kernel(T, Tp),
        out_shape=(jax.ShapeDtypeStruct((Tp, Hp), jnp.float32),
                   jax.ShapeDtypeStruct((1, Hp), jnp.float32)),
        grid_spec=pltpu.PrefetchScalarGridSpec(
            num_scalar_prefetch=0,
            grid=(n_chunks,),
            in_specs=[
                pl.BlockSpec((K, 3 * Hp), lambda i: (i, 0)),      # gi chunk
                pl.BlockSpec((1, Hp), lambda i: (0, 0)),          # h0
                pl.BlockSpec((Hp, 3 * Hp), lambda i: (0, 0)),     # W_hh (resident)
                pl.BlockSpec((1, Hp), lambda i: (0, 0)),          # b_hh_n
            ],
            out_specs=(
                pl.BlockSpec((K, Hp), lambda i: (i, 0)),          # per-step hidden
                pl.BlockSpec((1, Hp), lambda i: (0, 0)),          # carried hidden
            ),
        ),
        compiler_params=pltpu.CompilerParams(
            dimension_semantics=("arbitrary",)),
    )(gi, h0, kp["w_hh"], kp["b_hn"])

    # ---- Phase 3: batched decode (parallel over time chunks).
    logits_p = pl.pallas_call(
        decode_kernel,
        out_shape=jax.ShapeDtypeStruct((Tp, Op), jnp.float32),
        grid_spec=pltpu.PrefetchScalarGridSpec(
            num_scalar_prefetch=0,
            grid=(n_chunks,),
            in_specs=[
                pl.BlockSpec((K, Hp), lambda i: (i, 0)),
                pl.BlockSpec((Hp, Op), lambda i: (0, 0)),         # W_dec (resident)
                pl.BlockSpec((1, Op), lambda i: (0, 0)),
            ],
            out_specs=pl.BlockSpec((K, Op), lambda i: (i, 0)),
        ),
        compiler_params=pltpu.CompilerParams(
            dimension_semantics=("parallel",)),
    )(h_all, kp["w_dec"], kp["b_dec"])

    logits = logits_p[:T, :O]                 # un-pad time and lane dims
    hidden = h_last[:, :H].reshape(1, 1, H)
    return logits, hidden


def rnn_forward(token, hidden, kp):
    """Single-step forward, same signature/semantics as the PyTorch module."""
    logits, h_new = rnn_forward_seq(token.reshape(1), hidden, kp)
    return logits, h_new                      # (1, O), (1, 1, H)


# -----------------------------------------------------------------------------
# Parameters
# -----------------------------------------------------------------------------
def init_params(key, input_size, hidden_size, output_size):
    """PyTorch-equivalent f32 params (weights stored pre-transposed: (in, out))."""
    H, V, O = hidden_size, input_size, output_size
    ks = jax.random.split(key, 7)
    s = 1.0 / jnp.sqrt(H)
    u = lambda k, shp: jax.random.uniform(k, shp, jnp.float32, -s, s)
    return {
        "emb":     jax.random.normal(ks[0], (V, H), jnp.float32),  # nn.Embedding
        "w_ih_t":  u(ks[1], (H, 3 * H)),     # GRU weight_ih_l0^T, gates [r|z|n]
        "w_hh_t":  u(ks[2], (H, 3 * H)),     # GRU weight_hh_l0^T
        "b_ih":    u(ks[3], (3 * H,)),
        "b_hh":    u(ks[4], (3 * H,)),
        "w_dec_t": u(ks[5], (H, O)),         # nn.Linear weight^T
        "b_dec":   u(ks[6], (O,)),
    }


def prepare_kernel_params(p):
    """Pad to 128 lanes, align gate slabs, fold biases, cast weights to bf16."""
    V, H = p["emb"].shape
    O = p["w_dec_t"].shape[1]
    Hp = _round_up(H, LANE)
    Op = _round_up(O, LANE)
    Vp = _round_up(V, LANE)

    def pad2(x, r, c):
        return jnp.zeros((r, c), x.dtype).at[:x.shape[0], :x.shape[1]].set(x)

    def pad_gates(w):  # (H, 3H) -> (Hp, 3Hp), each gate slab 128-aligned
        out = jnp.zeros((Hp, 3 * Hp), jnp.float32)
        for g in range(3):
            out = out.at[:H, g * Hp:g * Hp + H].set(w[:, g * H:(g + 1) * H])
        return out

    def pad_gate_vec(b):  # (3H,) -> (1, 3Hp)
        out = jnp.zeros((1, 3 * Hp), jnp.float32)
        for g in range(3):
            out = out.at[0, g * Hp:g * Hp + H].set(b[g * H:(g + 1) * H])
        return out

    # Folded gate bias: [b_ih_r + b_hh_r | b_ih_z + b_hh_z | b_ih_n]
    b_fused = jnp.concatenate(
        [p["b_ih"][:2 * H] + p["b_hh"][:2 * H], p["b_ih"][2 * H:]], axis=0)

    return {
        "H": H, "O": O, "Hp": Hp, "Op": Op,
        "emb":   pad2(p["emb"], Vp, Hp).astype(jnp.bfloat16),
        "w_ih":  pad_gates(p["w_ih_t"]).astype(jnp.bfloat16),
        "w_hh":  pad_gates(p["w_hh_t"]).astype(jnp.bfloat16),
        "b_i":   pad_gate_vec(b_fused),                               # f32
        "b_hn":  pad2(p["b_hh"][2 * H:].reshape(1, H), 1, Hp),        # f32
        "w_dec": pad2(p["w_dec_t"], Hp, Op).astype(jnp.bfloat16),
        "b_dec": pad2(p["b_dec"].reshape(1, O), 1, Op),               # f32
    }


# -----------------------------------------------------------------------------
# Pure-JAX reference (PyTorch semantics; matmul_dtype lets us mirror the
# kernel's bf16 matmul operands exactly for a tight numerical check).
# -----------------------------------------------------------------------------
def rnn_forward_seq_ref(tokens, hidden0, params, matmul_dtype=jnp.float32):
    H = params["emb"].shape[1]
    cast = lambda a: a.astype(matmul_dtype)
    h = hidden0.reshape(1, H).astype(jnp.float32)
    outs = []
    for t in range(int(tokens.shape[0])):
        x = params["emb"][tokens[t]].reshape(1, H)
        gi = jnp.dot(cast(x), cast(params["w_ih_t"]),
                     preferred_element_type=jnp.float32) + params["b_ih"]
        gh = jnp.dot(cast(h), cast(params["w_hh_t"]),
                     preferred_element_type=jnp.float32) + params["b_hh"]
        i_r, i_z, i_n = gi[:, :H], gi[:, H:2 * H], gi[:, 2 * H:]
        h_r, h_z, h_n = gh[:, :H], gh[:, H:2 * H], gh[:, 2 * H:]
        r = jax.nn.sigmoid(i_r + h_r)
        z = jax.nn.sigmoid(i_z + h_z)
        n = jnp.tanh(i_n + r * h_n)
        h = (1.0 - z) * n + z * h
        outs.append(jnp.dot(cast(h), cast(params["w_dec_t"]),
                            preferred_element_type=jnp.float32) + params["b_dec"])
    return jnp.concatenate(outs, axis=0), h.reshape(1, 1, H)


if __name__ == "__main__":
    input_size, hidden_size, output_size = 16, 32, 16   # small synthetic sizes

    key = jax.random.PRNGKey(0)
    params = init_params(key, input_size, hidden_size, output_size)
    kparams = prepare_kernel_params(params)

    hidden0 = jnp.zeros((1, 1, hidden_size), jnp.float32)   # init_hidden()

    # (a) single-step forward: same call signature as the PyTorch module.
    token = jnp.array([3], dtype=jnp.int32)
    out1, h1 = rnn_forward(token, hidden0, kparams)
    jax.block_until_ready((out1, h1))
    assert out1.shape == (1, output_size) and h1.shape == (1, 1, hidden_size)

    # (b) multi-step: one kernel pipeline == T calls of the module's forward().
    T = 8
    tokens = jax.random.randint(jax.random.PRNGKey(1), (T,), 0, input_size,
                                dtype=jnp.int32)
    logits, hT = rnn_forward_seq(tokens, hidden0, kparams)
    jax.block_until_ready((logits, hT))
    assert logits.shape == (T, output_size) and hT.shape == (1, 1, hidden_size)

    # (c) a length that does not divide the time chunk (exercises tail mask).
    T2 = 5
    tokens2 = jax.random.randint(jax.random.PRNGKey(2), (T2,), 0, input_size,
                                 dtype=jnp.int32)
    logits2, hT2 = rnn_forward_seq(tokens2, hidden0, kparams)
    jax.block_until_ready((logits2, hT2))
    assert logits2.shape == (T2, output_size)

    # Tight check against a reference using the same bf16 matmul operands.
    out1_r, h1_r = rnn_forward_seq_ref(token, hidden0, params, jnp.bfloat16)
    log_r, hT_r = rnn_forward_seq_ref(tokens, hidden0, params, jnp.bfloat16)
    log2_r, hT2_r = rnn_forward_seq_ref(tokens2, hidden0, params, jnp.bfloat16)
    assert jnp.allclose(out1, out1_r, atol=1e-3, rtol=1e-3)
    assert jnp.allclose(h1, h1_r, atol=1e-3, rtol=1e-3)
    assert jnp.allclose(logits, log_r, atol=1e-3, rtol=1e-3)
    assert jnp.allclose(hT, hT_r, atol=1e-3, rtol=1e-3)
    assert jnp.allclose(logits2, log2_r, atol=1e-3, rtol=1e-3)
    assert jnp.allclose(hT2, hT2_r, atol=1e-3, rtol=1e-3)

    # Loose sanity check against full-f32 PyTorch semantics (bf16 weight quant).
    log_f32, hT_f32 = rnn_forward_seq_ref(tokens, hidden0, params, jnp.float32)
    assert jnp.allclose(logits, log_f32, atol=5e-2, rtol=5e-2)
    assert jnp.allclose(hT, hT_f32, atol=5e-2, rtol=5e-2)

    print("KERNEL_OK")
</pallas_src>

<mosaic_0001>
module attributes {stable_mosaic.version = 11 : i64} {
  func.func @encode_kernel(%arg0: i32, %arg1: memref<8x1xi32, #tpu.memory_space<vmem>>, %arg2: memref<128x128xbf16, #tpu.memory_space<vmem>>, %arg3: memref<128x384xbf16, #tpu.memory_space<vmem>>, %arg4: memref<1x384xf32, #tpu.memory_space<vmem>>, %arg5: memref<8x384xf32, #tpu.memory_space<vmem>>) attributes {dimension_semantics = [#tpu.dimension_semantics<parallel>], iteration_bounds = array<i64: 1>, scalar_prefetch = 0 : i64, scratch_operands = 0 : i64, tpu.core_type = #tpu.core_type<tc>, window_params = [{transform_indices = @transform_0, window_bounds = array<i64: 8, 1>}, {pipeline_mode = #tpu.pipeline_mode<synchronous>, transform_indices = @transform_1, window_bounds = array<i64: 128, 128>}, {pipeline_mode = #tpu.pipeline_mode<synchronous>, transform_indices = @transform_2, window_bounds = array<i64: 128, 384>}, {pipeline_mode = #tpu.pipeline_mode<synchronous>, transform_indices = @transform_3, window_bounds = array<i64: 1, 384>}, {transform_indices = @transform_4, window_bounds = array<i64: 8, 384>}]} {
    %c0 = arith.constant 0 : index
    %c0_0 = arith.constant 0 : index
    %0 = vector.load %arg1[%c0, %c0_0] : memref<8x1xi32, #tpu.memory_space<vmem>>, vector<8x1xi32>
    %1 = tpu.iota {dimensions = array<i32: 1>} : vector<8x128xi32>
    %2 = vector.broadcast %0 : vector<8x1xi32> to vector<8x128xi32>
    %3 = arith.cmpi eq, %1, %2 : vector<8x128xi32>
    %4 = arith.extui %3 : vector<8x128xi1> to vector<8x128xi32>
    %5 = arith.sitofp %4 : vector<8x128xi32> to vector<8x128xf32>
    %6 = arith.truncf %5 : vector<8x128xf32> to vector<8x128xbf16>
    %c0_1 = arith.constant 0 : index
    %c0_2 = arith.constant 0 : index
    %7 = vector.load %arg2[%c0_1, %c0_2] : memref<128x128xbf16, #tpu.memory_space<vmem>>, vector<128x128xbf16>
    %cst = arith.constant dense<0.000000e+00> : vector<8x128xf32>
    %8 = tpu.matmul %6, %7, %cst {dimension_numbers = #tpu.dot_dimension_numbers<[1], [0], [0], [1], [0, 0, 1, 1], [], []>} : vector<8x128xbf16>, vector<128x128xbf16>, vector<8x128xf32> -> vector<8x128xf32>
    %9 = arith.truncf %8 : vector<8x128xf32> to vector<8x128xbf16>
    %c0_3 = arith.constant 0 : index
    %c0_4 = arith.constant 0 : index
    %10 = vector.load %arg3[%c0_3, %c0_4] : memref<128x384xbf16, #tpu.memory_space<vmem>>, vector<128x384xbf16>
    %cst_5 = arith.constant dense<0.000000e+00> : vector<8x384xf32>
    %11 = tpu.matmul %9, %10, %cst_5 {dimension_numbers = #tpu.dot_dimension_numbers<[1], [0], [0], [1], [0, 0, 1, 1], [], []>} : vector<8x128xbf16>, vector<128x384xbf16>, vector<8x384xf32> -> vector<8x384xf32>
    %c0_6 = arith.constant 0 : index
    %c0_7 = arith.constant 0 : index
    %12 = vector.load %arg4[%c0_6, %c0_7] : memref<1x384xf32, #tpu.memory_space<vmem>>, vector<1x384xf32>
    %13 = vector.broadcast %12 : vector<1x384xf32> to vector<8x384xf32>
    %14 = arith.addf %11, %13 : vector<8x384xf32>
    %c0_8 = arith.constant 0 : index
    %c0_9 = arith.constant 0 : index
    %15 = vector.load %arg5[%c0_8, %c0_9] : memref<8x384xf32, #tpu.memory_space<vmem>>, vector<8x384xf32>
    tpu.vector_store %arg5[%c0_8, %c0_9], %14 {strides = array<i32>} : memref<8x384xf32, #tpu.memory_space<vmem>>, vector<8x384xf32>,
    return
  }
  func.func @transform_0(%arg0: i32) -> (i32, i32) {
    %c0_i32 = arith.constant 0 : i32
    %c0_i32_0 = arith.constant 0 : i32
    return %arg0, %c0_i32 : i32, i32
  }
  func.func @transform_1(%arg0: i32) -> (i32, i32) {
    %c0_i32 = arith.constant 0 : i32
    %c0_i32_0 = arith.constant 0 : i32
    %c0_i32_1 = arith.constant 0 : i32
    return %c0_i32, %c0_i32_0 : i32, i32
  }
  func.func @transform_2(%arg0: i32) -> (i32, i32) {
    %c0_i32 = arith.constant 0 : i32
    %c0_i32_0 = arith.constant 0 : i32
    %c0_i32_1 = arith.constant 0 : i32
    return %c0_i32, %c0_i32_0 : i32, i32
  }
  func.func @transform_3(%arg0: i32) -> (i32, i32) {
    %c0_i32 = arith.constant 0 : i32
    %c0_i32_0 = arith.constant 0 : i32
    %c0_i32_1 = arith.constant 0 : i32
    return %c0_i32, %c0_i32_0 : i32, i32
  }
  func.func @transform_4(%arg0: i32) -> (i32, i32) {
    %c0_i32 = arith.constant 0 : i32
    %c0_i32_0 = arith.constant 0 : i32
    return %arg0, %c0_i32 : i32, i32
  }
}

</mosaic_0001>

<llo_original>
// kernel: tpu_custom_call.1
$region0: #{tpu_custom_call.1}
  #allocation0 [shape = 'u32[]', space=smem, size = 0x4, offset = 0x4, fixed_abs, tag = 'smem constant byte address 0x4 - core index']
  #allocation1 [shape = 'u32[72,128]{1,0:T(1,128)}', space=vmem, size = 0x9000, scoped, tag = 'internal scratch']
  %s0 = inlined_call_operand.vmem [shape: s32[8,1], index: 0, kind: input, shape index: {}]
  %s1 = inlined_call_operand.hbm [shape: bf16[128,128], index: 1, kind: input, shape index: {}]
  %s2 = inlined_call_operand.hbm [shape: bf16[128,384], index: 2, kind: input, shape index: {}]
  %s3 = inlined_call_operand.vmem [shape: f32[1,384], index: 3, kind: input, shape index: {}]
  %s4 = inlined_call_operand.hbm [shape: f32[8,384], index: 4, kind: output, shape index: {}]
  %s5 = sld [smem:[#allocation0]]
  $region34: #{tpu_custom_call.1} parent=0
    _
  %s7 = ssub.s32 1, %s5
  %s8 = scalar_select 0, %s7, %s5
  $region1: #{tpu_custom_call.1} parent=0
    #allocation2 [shape = 'u8[32768]{0}', space=vmem, size = 0x8000, scoped, tag = 'input window, operand 1, single buffered']
    #allocation3 [shape = 's32[1]{0}', space=sflag, size = 0x4, scoped, tag = 'scoped memory for tpu_custom_call.1']
    #allocation4 [shape = 's32[1]{0}', space=sflag, size = 0x4, scoped, tag = 'scoped memory for tpu_custom_call.1']
    #allocation5 [shape = 'u8[98304]{0}', space=vmem, size = 0x18000, scoped, tag = 'input window, operand 2, single buffered']
    #allocation6 [shape = 's32[1]{0}', space=sflag, size = 0x4, scoped, tag = 'scoped memory for tpu_custom_call.1']
    #allocation7 [shape = 'u8[12288]{0}', space=vmem, size = 0x3000, scoped, tag = 'output window, operand 0, single buffered']
    %9 = vsyncpa [#allocation3], 0
    %10 = vsyncpa [#allocation6], 0
    %11 = vsyncpa [#allocation4], 0
    // Predicated region
    $region2: #{tpu_custom_call.1} parent=1 // pred_check
      _
    $region3: #{tpu_custom_call.1} parent=1 // pred_check_branch
      %13 = sbr.rel (0) target = $region5
    $region4: #{tpu_custom_call.1} parent=1 // pred_region
      _
    $region5: #{tpu_custom_call.1} parent=1 // pred_fallthru
      _
    // Predicated region
    $region6: #{tpu_custom_call.1} parent=1 // pred_check
      _
    $region7: #{tpu_custom_call.1} parent=1 // pred_check_branch
      %15 = sbr.rel (0) target = $region9
    $region8: #{tpu_custom_call.1} parent=1 // pred_region
      %17 = vsyncadd [#allocation3], 0
      %s18 = sshll.u32 %s1, 4
      %s19 = int_to_ptr.hbm [resolvable:$true] %s18
      %s20 = sshll.u32 [#allocation2], 4
      %s21 = int_to_ptr.vmem [resolvable:$true] %s20
      %26 = dma.hbm_to_vmem [thread:$0]  %s19, 1024, %s21, [#allocation3], 64, 64, 4
    $region9: #{tpu_custom_call.1} parent=1 // pred_fallthru
      _
    // Predicated region
    $region10: #{tpu_custom_call.1} parent=1 // pred_check
      _
    $region11: #{tpu_custom_call.1} parent=1 // pred_check_branch
      %28 = sbr.rel (0) target = $region13
    $region12: #{tpu_custom_call.1} parent=1 // pred_region
      %30 = vsyncadd [#allocation6], 0
      %s31 = sshll.u32 %s2, 4
      %s32 = int_to_ptr.hbm [resolvable:$true] %s31
      %s33 = sshll.u32 [#allocation5], 4
      %s34 = int_to_ptr.vmem [resolvable:$true] %s33
      %39 = dma.hbm_to_vmem [thread:$0]  %s32, 3072, %s34, [#allocation6], 192, 192, 12
    $region13: #{tpu_custom_call.1} parent=1 // pred_fallthru
      _
    // Predicated region
    $region14: #{tpu_custom_call.1} parent=1 // pred_check
      _
    $region15: #{tpu_custom_call.1} parent=1 // pred_check_branch
      %41 = sbr.rel (0) target = $region17
    $region16: #{tpu_custom_call.1} parent=1 // pred_region
      _
    $region17: #{tpu_custom_call.1} parent=1 // pred_fallthru
      _
    // Predicated region
    $region18: #{tpu_custom_call.1} parent=1 // pred_check
      _
    $region19: #{tpu_custom_call.1} parent=1 // pred_check_branch
      %43 = sbr.rel (0) target = $region21
    $region20: #{tpu_custom_call.1} parent=1 // pred_region
      %45 = dma.done [#allocation3], 1024
    $region21: #{tpu_custom_call.1} parent=1 // pred_fallthru
      _
    // Predicated region
    $region22: #{tpu_custom_call.1} parent=1 // pred_check
      _
    $region23: #{tpu_custom_call.1} parent=1 // pred_check_branch
      %47 = sbr.rel (0) target = $region25
    $region24: #{tpu_custom_call.1} parent=1 // pred_region
      %49 = dma.done [#allocation6], 3072
    $region25: #{tpu_custom_call.1} parent=1 // pred_fallthru
      _
    %v50 = vld [vmem:[%s0] sm:$0xff]
    %v51 = vlaneseq
    %v52 = vand.u32 %v51, 127
    %53 = vset.pattern.permute.xlu0 0
    %54 = vperm.xlu0 %53, %v50
    %v55 = vpop.permute.xlu0 %54
    %vm56 = vcmp.eq.s32.totalorder %v52, %v55
    %v57 = vsel %vm56, 1, 0
    %v58 = vcvt.s32.f32 %v57
    %v59 = vpack.c.bf16 %v58, %v58
    %v60 = vld [vmem:[#allocation2] sm:$0xf]
    %v61 = vld [vmem:[#allocation2 + $0x4] sm:$0xf]
    %v62 = vld [vmem:[#allocation2 + $0x8] sm:$0xf]
    %v63 = vld [vmem:[#allocation2 + $0xc] sm:$0xf]
    %v64 = vld [vmem:[#allocation2 + $0x10] sm:$0xf]
    %v65 = vld [vmem:[#allocation2 + $0x14] sm:$0xf]
    %v66 = vld [vmem:[#allocation2 + $0x18] sm:$0xf]
    %v67 = vld [vmem:[#allocation2 + $0x1c] sm:$0xf]
    %v68 = vld [vmem:[#allocation2 + $0x20] sm:$0xf]
    %v69 = vld [vmem:[#allocation2 + $0x24] sm:$0xf]
    %v70 = vld [vmem:[#allocation2 + $0x28] sm:$0xf]
    %v71 = vld [vmem:[#allocation2 + $0x2c] sm:$0xf]
    %v72 = vld [vmem:[#allocation2 + $0x30] sm:$0xf]
    %v73 = vld [vmem:[#allocation2 + $0x34] sm:$0xf]
    %v74 = vld [vmem:[#allocation2 + $0x38] sm:$0xf]
    %v75 = vld [vmem:[#allocation2 + $0x3c] sm:$0xf]
    %v92 = vunpack.c.l.b16 %v60
    %v93 = vunpack.c.l.b16 %v61
    %v94 = vunpack.c.l.b16 %v62
    %v95 = vunpack.c.l.b16 %v63
    %v96 = vunpack.c.l.b16 %v64
    %v97 = vunpack.c.l.b16 %v65
    %v98 = vunpack.c.l.b16 %v66
    %v99 = vunpack.c.l.b16 %v67
    %v100 = vunpack.c.l.b16 %v68
    %v101 = vunpack.c.l.b16 %v69
    %v102 = vunpack.c.l.b16 %v70
    %v103 = vunpack.c.l.b16 %v71
    %v104 = vunpack.c.l.b16 %v72
    %v105 = vunpack.c.l.b16 %v73
    %v106 = vunpack.c.l.b16 %v74
    %v107 = vunpack.c.l.b16 %v75
    %v108 = vpack.c.b16 %v93, %v92
    %v109 = vpack.c.b16 %v95, %v94
    %v110 = vpack.c.b16 %v97, %v96
    %v111 = vpack.c.b16 %v99, %v98
    %v112 = vpack.c.b16 %v101, %v100
    %v113 = vpack.c.b16 %v103, %v102
    %v114 = vpack.c.b16 %v105, %v104
    %v115 = vpack.c.b16 %v107, %v106
    %124 = vmatpush.bf16.msra.mxu0 %v115
    %125 = vmatpush.bf16.msra.mxu0 %v114
    %126 = vmatpush.bf16.msra.mxu0 %v113
    %127 = vmatpush.bf16.msra.mxu0 %v112
    %128 = vmatpush.bf16.msra.mxu0 %v111
    %129 = vmatpush.bf16.msra.mxu0 %v110
    %130 = vmatpush.bf16.msra.mxu0 %v109
    %131 = vmatpush.bf16.msra.mxu0 %v108
    %132 = vmatmul.bf16.gmra.mxu0 %v59
    %v133 = vpop.f32.mrf.mxu0
    %v134 = vadd.f32 0.0, %v133
    %v135 = vpop.f32.mrf.mxu0
    %136 = vdwg.mxu0
    %v137 = vpack.c.bf16 %v134, %v134
    %v138 = vld [vmem:[#allocation5] sm:$0xff]
    %v139 = vld [vmem:[#allocation5 + $0x8] sm:$0xf]
    %v140 = vld [vmem:[#allocation5 + $0xc] sm:$0xff]
    %v141 = vld [vmem:[#allocation5 + $0x14] sm:$0xf]
    %v142 = vld [vmem:[#allocation5 + $0x18] sm:$0xff]
    %v143 = vld [vmem:[#allocation5 + $0x20] sm:$0xf]
    %v144 = vld [vmem:[#allocation5 + $0x24] sm:$0xff]
    %v145 = vld [vmem:[#allocation5 + $0x2c] sm:$0xf]
    %v146 = vld [vmem:[#allocation5 + $0x30] sm:$0xff]
    %v147 = vld [vmem:[#allocation5 + $0x38] sm:$0xf]
    %v148 = vld [vmem:[#allocation5 + $0x3c] sm:$0xff]
    %v149 = vld [vmem:[#allocation5 + $0x44] sm:$0xf]
    %v150 = vld [vmem:[#allocation5 + $0x48] sm:$0xff]
    %v151 = vld [vmem:[#allocation5 + $0x50] sm:$0xf]
    %v152 = vld [vmem:[#allocation5 + $0x54] sm:$0xff]
    %v153 = vld [vmem:[#allocation5 + $0x5c] sm:$0xf]
    %v154 = vld [vmem:[#allocation5 + $0x60] sm:$0xff]
    %v155 = vld [vmem:[#allocation5 + $0x68] sm:$0xf]
    %v156 = vld [vmem:[#allocation5 + $0x6c] sm:$0xff]
    %v157 = vld [vmem:[#allocation5 + $0x74] sm:$0xf]
    %v158 = vld [vmem:[#allocation5 + $0x78] sm:$0xff]
    %v159 = vld [vmem:[#allocation5 + $0x80] sm:$0xf]
    %v160 = vld [vmem:[#allocation5 + $0x84] sm:$0xff]
    %v161 = vld [vmem:[#allocation5 + $0x8c] sm:$0xf]
    %v162 = vld [vmem:[#allocation5 + $0x90] sm:$0xff]
    %v163 = vld [vmem:[#allocation5 + $0x98] sm:$0xf]
    %v164 = vld [vmem:[#allocation5 + $0x9c] sm:$0xff]
    %v165 = vld [vmem:[#allocation5 + $0xa4] sm:$0xf]
    %v166 = vld [vmem:[#allocation5 + $0xa8] sm:$0xff]
    %v167 = vld [vmem:[#allocation5 + $0xb0] sm:$0xf]
    %v168 = vld [vmem:[#allocation5 + $0xb4] sm:$0xff]
    %v169 = vld [vmem:[#allocation5 + $0xbc] sm:$0xf]
    %v170 = vld [vmem:[%s3] sm:$0x7]
    %v172 = vperm.slane %v170, 0
    %v173 = vperm.slane %v170, 1
    %v174 = vperm.slane %v170, 2
    %v210 = vunpack.c.l.b16 %v138
    %v211 = vunpack.c.h.b16 %v138
    %v212 = vunpack.c.l.b16 %v139
    %v213 = vunpack.c.l.b16 %v140
    %v214 = vunpack.c.h.b16 %v140
    %v215 = vunpack.c.l.b16 %v141
    %v216 = vunpack.c.l.b16 %v142
    %v217 = vunpack.c.h.b16 %v142
    %v218 = vunpack.c.l.b16 %v143
    %v219 = vunpack.c.l.b16 %v144
    %v220 = vunpack.c.h.b16 %v144
    %v221 = vunpack.c.l.b16 %v145
    %v222 = vunpack.c.l.b16 %v146
    %v223 = vunpack.c.h.b16 %v146
    %v224 = vunpack.c.l.b16 %v147
    %v225 = vunpack.c.l.b16 %v148
    %v226 = vunpack.c.h.b16 %v148
    %v227 = vunpack.c.l.b16 %v149
    %v228 = vunpack.c.l.b16 %v150
    %v229 = vunpack.c.h.b16 %v150
    %v230 = vunpack.c.l.b16 %v151
    %v231 = vunpack.c.l.b16 %v152
    %v232 = vunpack.c.h.b16 %v152
    %v233 = vunpack.c.l.b16 %v153
    %v234 = vunpack.c.l.b16 %v154
    %v235 = vunpack.c.h.b16 %v154
    %v236 = vunpack.c.l.b16 %v155
    %v237 = vunpack.c.l.b16 %v156
    %v238 = vunpack.c.h.b16 %v156
    %v239 = vunpack.c.l.b16 %v157
    %v240 = vunpack.c.l.b16 %v158
    %v241 = vunpack.c.h.b16 %v158
    %v242 = vunpack.c.l.b16 %v159
    %v243 = vunpack.c.l.b16 %v160
    %v244 = vunpack.c.h.b16 %v160
    %v245 = vunpack.c.l.b16 %v161
    %v246 = vunpack.c.l.b16 %v162
    %v247 = vunpack.c.h.b16 %v162
    %v248 = vunpack.c.l.b16 %v163
    %v249 = vunpack.c.l.b16 %v164
    %v250 = vunpack.c.h.b16 %v164
    %v251 = vunpack.c.l.b16 %v165
    %v252 = vunpack.c.l.b16 %v166
    %v253 = vunpack.c.h.b16 %v166
    %v254 = vunpack.c.l.b16 %v167
    %v255 = vunpack.c.l.b16 %v168
    %v256 = vunpack.c.h.b16 %v168
    %v257 = vunpack.c.l.b16 %v169
    %v258 = vpack.c.b16 %v213, %v210
    %v259 = vpack.c.b16 %v214, %v211
    %v260 = vpack.c.b16 %v215, %v212
    %v261 = vpack.c.b16 %v219, %v216
    %v262 = vpack.c.b16 %v220, %v217
    %v263 = vpack.c.b16 %v221, %v218
    %v264 = vpack.c.b16 %v225, %v222
    %v265 = vpack.c.b16 %v226, %v223
    %v266 = vpack.c.b16 %v227, %v224
    %v267 = vpack.c.b16 %v231, %v228
    %v268 = vpack.c.b16 %v232, %v229
    %v269 = vpack.c.b16 %v233, %v230
    %v270 = vpack.c.b16 %v237, %v234
    %v271 = vpack.c.b16 %v238, %v235
    %v272 = vpack.c.b16 %v239, %v236
    %v273 = vpack.c.b16 %v243, %v240
    %v274 = vpack.c.b16 %v244, %v241
    %v275 = vpack.c.b16 %v245, %v242
    %v276 = vpack.c.b16 %v249, %v246
    %v277 = vpack.c.b16 %v250, %v247
    %v278 = vpack.c.b16 %v251, %v248
    %v279 = vpack.c.b16 %v255, %v252
    %v280 = vpack.c.b16 %v256, %v253
    %v281 = vpack.c.b16 %v257, %v254
    %306 = vmatpush.bf16.msra.mxu0 %v279
    %307 = vmatpush.bf16.msra.mxu0 %v276
    %308 = vmatpush.bf16.msra.mxu0 %v273
    %309 = vmatpush.bf16.msra.mxu0 %v270
    %310 = vmatpush.bf16.msra.mxu0 %v267
    %311 = vmatpush.bf16.msra.mxu0 %v264
    %312 = vmatpush.bf16.msra.mxu0 %v261
    %313 = vmatpush.bf16.msra.mxu0 %v258
    %314 = vmatmul.bf16.gmra.mxu0 %v137
    %v315 = vpop.f32.mrf.mxu0
    %v316 = vadd.f32 %v172, %v315
    %v317 = vpop.f32.mrf.mxu0
    %318 = vdwg.mxu0
    %319 = vmatpush.bf16.msra.mxu0 %v280
    %320 = vmatpush.bf16.msra.mxu0 %v277
    %321 = vmatpush.bf16.msra.mxu0 %v274
    %322 = vmatpush.bf16.msra.mxu0 %v271
    %323 = vmatpush.bf16.msra.mxu0 %v268
    %324 = vmatpush.bf16.msra.mxu0 %v265
    %325 = vmatpush.bf16.msra.mxu0 %v262
    %326 = vmatpush.bf16.msra.mxu0 %v259
    %327 = vmatmul.bf16.gmra.mxu0 %v137
    %v328 = vpop.f32.mrf.mxu0
    %v329 = vadd.f32 %v173, %v328
    %v330 = vpop.f32.mrf.mxu0
    %331 = vdwg.mxu0
    %332 = vmatpush.bf16.msra.mxu0 %v281
    %333 = vmatpush.bf16.msra.mxu0 %v278
    %334 = vmatpush.bf16.msra.mxu0 %v275
    %335 = vmatpush.bf16.msra.mxu0 %v272
    %336 = vmatpush.bf16.msra.mxu0 %v269
    %337 = vmatpush.bf16.msra.mxu0 %v266
    %338 = vmatpush.bf16.msra.mxu0 %v263
    %339 = vmatpush.bf16.msra.mxu0 %v260
    %340 = vmatmul.bf16.gmra.mxu0 %v137
    %v341 = vpop.f32.mrf.mxu0
    %v342 = vadd.f32 %v174, %v341
    %v343 = vpop.f32.mrf.mxu0
    %344 = vdwg.mxu0
    %345 = vst [vmem:[#allocation7] sm:$0xff] %v316
    %346 = vst [vmem:[#allocation7 + $0x8] sm:$0xff] %v329
    %347 = vst [vmem:[#allocation7 + $0x10] sm:$0xff] %v342
    // Predicated region
    $region26: #{tpu_custom_call.1} parent=1 // pred_check
      _
    $region27: #{tpu_custom_call.1} parent=1 // pred_check_branch
      %349 = sbr.rel (0) target = $region29
    $region28: #{tpu_custom_call.1} parent=1 // pred_region
      %351 = vsyncadd [#allocation4], 0
      %s353 = sshll.u32 [#allocation7], 4
      %s354 = int_to_ptr.vmem [resolvable:$true] %s353
      %s355 = sshll.u32 %s4, 4
      %s356 = int_to_ptr.hbm [resolvable:$true] %s355
      %358 = dma.vmem_to_hbm [thread:$0]  %s354, 384, %s356, [#allocation4]
    $region29: #{tpu_custom_call.1} parent=1 // pred_fallthru
      _
    // Predicated region
    $region30: #{tpu_custom_call.1} parent=1 // pred_check
      _
    $region31: #{tpu_custom_call.1} parent=1 // pred_check_branch
      %360 = sbr.rel (0) target = $region33
    $region32: #{tpu_custom_call.1} parent=1 // pred_region
      %362 = dma.done [#allocation4], 384
    $region33: #{tpu_custom_call.1} parent=1 // pred_fallthru
      _
    %363 = vsyncpa [#allocation3], 1
    %364 = vsyncpa [#allocation6], 1
    %365 = vsyncpa [#allocation4], 1

</llo_original>
